<compile_context>
chip_gen: v7x
topology: tpu7x:2x2x1
jax: 0.10.0
libtpu: 0.0.40
codegen_flags: <defaults>
</compile_context>

<pallas_src>
import jax
import jax.numpy as jnp
from jax.experimental import pallas as pl
from jax.experimental.pallas import tpu as pltpu


def _trends_loss_kernel(out_ref, tgt_ref, w_ref, loss_ref):
    # out_ref / tgt_ref: (N, F) VMEM tiles; w_ref: (1, F) VMEM; loss_ref: (1, 1) SMEM.
    out = out_ref[...].astype(jnp.float32)                    # (N, F)
    tgt = tgt_ref[...].astype(jnp.float32)                    # (N, F)

    nom = jnp.sum(jnp.abs(out - tgt), axis=0, keepdims=True)  # (1, F)
    denom = jnp.sum(tgt, axis=0, keepdims=True)               # (1, F)

    weighted = w_ref[...] * nom / denom                       # (1, F)
    loss_ref[0, 0] = jnp.sum(weighted)                        # scalar -> SMEM


@jax.jit
def trends_loss(output: jax.Array, target: jax.Array, weights: jax.Array) -> jax.Array:
    """Returns a scalar f32 loss.

    output/target: (N, F) arrays (any float dtype; cast to f32 in-kernel).
    weights: (F,) array of per-feature weights (runtime operand, no recompile).
    """
    n, f = output.shape
    assert target.shape == (n, f)
    w = jnp.asarray(weights, dtype=jnp.float32).reshape(1, f)

    # Single block, no grid: block shapes equal full array dims, so the
    # (8, 128) divisibility rule does not apply; inputs land directly in VMEM
    # and the scalar result goes straight to SMEM.
    res = pl.pallas_call(
        _trends_loss_kernel,
        out_shape=jax.ShapeDtypeStruct((1, 1), jnp.float32),
        in_specs=[
            pl.BlockSpec(memory_space=pltpu.MemorySpace.VMEM),
            pl.BlockSpec(memory_space=pltpu.MemorySpace.VMEM),
            pl.BlockSpec(memory_space=pltpu.MemorySpace.VMEM),
        ],
        out_specs=pl.BlockSpec(memory_space=pltpu.MemorySpace.SMEM),
    )(output, target, w)

    return res[0, 0]


def trends_loss_ref(output, target, weights):
    w = jnp.asarray(weights, dtype=jnp.float32)
    nom = jnp.sum(jnp.abs(output - target), axis=0)
    denom = jnp.sum(target, axis=0)
    return jnp.sum(w * nom / denom)


if __name__ == "__main__":
    # Deterministic parameters (from the module's __init__).
    weights = jnp.array([0.3, 0.175, 0.175, 0.175, 0.175], dtype=jnp.float32)

    # Deterministic example inputs (shapes implied by the module: (64, 5)).
    key = jax.random.PRNGKey(0)
    k_out, k_tgt = jax.random.split(key)
    output = jax.random.uniform(k_out, (64, 5), dtype=jnp.float32)
    target = jax.random.uniform(k_tgt, (64, 5), dtype=jnp.float32)

    loss = trends_loss(output, target, weights)
    loss = jax.block_until_ready(loss)

    ref = trends_loss_ref(output, target, weights)
    assert jnp.allclose(loss, ref, rtol=1e-5, atol=1e-6), (loss, ref)

    print("KERNEL_OK")
</pallas_src>

<mosaic_0001>
module attributes {stable_mosaic.version = 11 : i64} {
  func.func @_trends_loss_kernel(%arg0: memref<64x5xf32, #tpu.memory_space<vmem>>, %arg1: memref<64x5xf32, #tpu.memory_space<vmem>>, %arg2: memref<1x5xf32, #tpu.memory_space<vmem>>, %arg3: memref<1x1xf32, #tpu.memory_space<smem>>) attributes {dimension_semantics = [], scalar_prefetch = 0 : i64, scratch_operands = 0 : i64, tpu.core_type = #tpu.core_type<tc>} {
    %c0 = arith.constant 0 : index
    %c0_0 = arith.constant 0 : index
    %0 = vector.load %arg0[%c0, %c0_0] : memref<64x5xf32, #tpu.memory_space<vmem>>, vector<64x5xf32>
    %c0_1 = arith.constant 0 : index
    %c0_2 = arith.constant 0 : index
    %1 = vector.load %arg1[%c0_1, %c0_2] : memref<64x5xf32, #tpu.memory_space<vmem>>, vector<64x5xf32>
    %2 = arith.subf %0, %1 : vector<64x5xf32>
    %3 = math.absf %2 : vector<64x5xf32>
    %cst = arith.constant dense<0.000000e+00> : vector<5xf32>
    %4 = vector.multi_reduction <add>, %3, %cst [0] : vector<64x5xf32> to vector<5xf32>
    %5 = vector.shape_cast %4 : vector<5xf32> to vector<1x5xf32>
    %cst_3 = arith.constant dense<0.000000e+00> : vector<5xf32>
    %6 = vector.multi_reduction <add>, %1, %cst_3 [0] : vector<64x5xf32> to vector<5xf32>
    %7 = vector.shape_cast %6 : vector<5xf32> to vector<1x5xf32>
    %c0_4 = arith.constant 0 : index
    %c0_5 = arith.constant 0 : index
    %8 = vector.load %arg2[%c0_4, %c0_5] : memref<1x5xf32, #tpu.memory_space<vmem>>, vector<1x5xf32>
    %9 = arith.mulf %8, %5 : vector<1x5xf32>
    %10 = arith.divf %9, %7 : vector<1x5xf32>
    %11 = vector.shape_cast %10 : vector<1x5xf32> to vector<1x1x5xf32>
    %cst_6 = arith.constant dense<0.000000e+00> : vector<1xf32>
    %12 = vector.multi_reduction <add>, %11, %cst_6 [1, 2] : vector<1x1x5xf32> to vector<1xf32>
    %13 = vector.shape_cast %12 : vector<1xf32> to vector<1x1x1xf32>
    %14 = vector.extract %13[0, 0, 0] : f32 from vector<1x1x1xf32>
    %c0_7 = arith.constant 0 : index
    %c0_8 = arith.constant 0 : index
    %15 = memref.load %arg3[%c0_7, %c0_8] : memref<1x1xf32, #tpu.memory_space<smem>>
    memref.store %14, %arg3[%c0_7, %c0_8] : memref<1x1xf32, #tpu.memory_space<smem>>
    return
  }
}

</mosaic_0001>

<llo_original>
// kernel: trends_loss.1
$region0: #{trends_loss.1}
  #allocation0 [shape = 'u32[]', space=smem, size = 0x4, offset = 0x4, fixed_abs, tag = 'smem constant byte address 0x4 - core index']
  #allocation1 [shape = 'u32[144,128]{1,0:T(1,128)}', space=vmem, size = 0x12000, scoped, tag = 'internal scratch']
  %s0 = inlined_call_operand.vmem [shape: f32[64,5], index: 0, kind: input, shape index: {}]
  %s1 = inlined_call_operand.vmem [shape: f32[64,5], index: 1, kind: input, shape index: {}]
  %s2 = inlined_call_operand.vmem [shape: f32[1,5], index: 2, kind: input, shape index: {}]
  %s3 = inlined_call_operand.hbm [shape: f32[1,1], index: 3, kind: output, shape index: {}]
  %s4 = sld [smem:[#allocation0]]
  $region22: #{trends_loss.1} parent=0
    _
  %s6 = ssub.s32 1, %s4
  %s7 = scalar_select 0, %s6, %s4
  $region1: #{trends_loss.1} parent=0
    #allocation2 [shape = 'u8[512]{0}', space=smem, size = 0x200, scoped, tag = 'output window, operand 0, single buffered']
    #allocation3 [shape = 's32[1]{0}', space=sflag, size = 0x4, scoped, tag = 'scoped memory for trends_loss.1']
    %8 = vsyncpa [#allocation3], 0
    // Predicated region
    $region2: #{trends_loss.1} parent=1 // pred_check
      _
    $region3: #{trends_loss.1} parent=1 // pred_check_branch
      %10 = sbr.rel (0) target = $region5
    $region4: #{trends_loss.1} parent=1 // pred_region
      _
    $region5: #{trends_loss.1} parent=1 // pred_fallthru
      _
    // Predicated region
    $region6: #{trends_loss.1} parent=1 // pred_check
      _
    $region7: #{trends_loss.1} parent=1 // pred_check_branch
      %12 = sbr.rel (0) target = $region9
    $region8: #{trends_loss.1} parent=1 // pred_region
      _
    $region9: #{trends_loss.1} parent=1 // pred_fallthru
      _
    // Predicated region
    $region10: #{trends_loss.1} parent=1 // pred_check
      _
    $region11: #{trends_loss.1} parent=1 // pred_check_branch
      %14 = sbr.rel (0) target = $region13
    $region12: #{trends_loss.1} parent=1 // pred_region
      _
    $region13: #{trends_loss.1} parent=1 // pred_fallthru
      _
    %v15 = vld [vmem:[%s0] sm:$0xff]
    %v16 = vld [vmem:[%s0 + $0x8] sm:$0xff]
    %v17 = vld [vmem:[%s0 + $0x10] sm:$0xff]
    %v18 = vld [vmem:[%s0 + $0x18] sm:$0xff]
    %v19 = vld [vmem:[%s0 + $0x20] sm:$0xff]
    %v20 = vld [vmem:[%s0 + $0x28] sm:$0xff]
    %v21 = vld [vmem:[%s0 + $0x30] sm:$0xff]
    %v22 = vld [vmem:[%s0 + $0x38] sm:$0xff]
    %v23 = vld [vmem:[%s1] sm:$0xff]
    %v24 = vld [vmem:[%s1 + $0x8] sm:$0xff]
    %v25 = vld [vmem:[%s1 + $0x10] sm:$0xff]
    %v26 = vld [vmem:[%s1 + $0x18] sm:$0xff]
    %v27 = vld [vmem:[%s1 + $0x20] sm:$0xff]
    %v28 = vld [vmem:[%s1 + $0x28] sm:$0xff]
    %v29 = vld [vmem:[%s1 + $0x30] sm:$0xff]
    %v30 = vld [vmem:[%s1 + $0x38] sm:$0xff]
    %v31 = vsub.f32 %v15, %v23
    %v32 = vsub.f32 %v16, %v24
    %v33 = vsub.f32 %v17, %v25
    %v34 = vsub.f32 %v18, %v26
    %v35 = vsub.f32 %v19, %v27
    %v36 = vsub.f32 %v20, %v28
    %v37 = vsub.f32 %v21, %v29
    %v38 = vsub.f32 %v22, %v30
    %v39 = vand.u32 2147483647, %v31
    %v40 = vand.u32 2147483647, %v32
    %v41 = vand.u32 2147483647, %v33
    %v42 = vand.u32 2147483647, %v34
    %v43 = vand.u32 2147483647, %v35
    %v44 = vand.u32 2147483647, %v36
    %v45 = vand.u32 2147483647, %v37
    %v46 = vand.u32 2147483647, %v38
    %vm47 = vcmask 39936
    %v48 = vsel %vm47, %v39, 0.0
    %v49 = vsel %vm47, %v40, 0.0
    %v50 = vadd.f32 %v48, %v49
    %v51 = vsel %vm47, %v41, 0.0
    %v52 = vadd.f32 %v50, %v51
    %v53 = vsel %vm47, %v42, 0.0
    %v54 = vadd.f32 %v52, %v53
    %v55 = vsel %vm47, %v43, 0.0
    %v56 = vadd.f32 %v54, %v55
    %v57 = vsel %vm47, %v44, 0.0
    %v58 = vadd.f32 %v56, %v57
    %v59 = vsel %vm47, %v45, 0.0
    %v60 = vadd.f32 %v58, %v59
    %v61 = vsel %vm47, %v46, 0.0
    %v62 = vadd.f32 %v60, %v61
    %v63 = vrot.slane %v62, 4
    %v64 = vadd.f32 %v62, %v63
    %v65 = vrot.slane %v64, 2
    %v66 = vadd.f32 %v64, %v65
    %v67 = vrot.slane %v66, 1
    %v68 = vadd.f32 %v66, %v67
    %v69 = vsel %vm47, %v23, 0.0
    %v70 = vsel %vm47, %v24, 0.0
    %v71 = vadd.f32 %v69, %v70
    %v72 = vsel %vm47, %v25, 0.0
    %v73 = vadd.f32 %v71, %v72
    %v74 = vsel %vm47, %v26, 0.0
    %v75 = vadd.f32 %v73, %v74
    %v76 = vsel %vm47, %v27, 0.0
    %v77 = vadd.f32 %v75, %v76
    %v78 = vsel %vm47, %v28, 0.0
    %v79 = vadd.f32 %v77, %v78
    %v80 = vsel %vm47, %v29, 0.0
    %v81 = vadd.f32 %v79, %v80
    %v82 = vsel %vm47, %v30, 0.0
    %v83 = vadd.f32 %v81, %v82
    %v84 = vrot.slane %v83, 4
    %v85 = vadd.f32 %v83, %v84
    %v86 = vrot.slane %v85, 2
    %v87 = vadd.f32 %v85, %v86
    %v88 = vrot.slane %v87, 1
    %v89 = vadd.f32 %v87, %v88
    %v90 = vld [vmem:[%s2] sm:$0x1]
    %v91 = vmul.f32 %v90, %v68
    %v92 = vrcp.pop %v89
    %v93 = vmul.f32 %v91, %v92
    %vm94 = vcmask 32768
    %v95 = vsel %vm94, %v93, 0.0
    %96 = vadd.xlane.f32.xlu0 %v95
    %v97 = vpop.xlane.xlu0 %96
    %v98 = vrot.slane %v97, 4
    %v99 = vadd.f32 %v97, %v98
    %v100 = vrot.slane %v99, 2
    %v101 = vadd.f32 %v99, %v100
    %v102 = vrot.slane %v101, 1
    %v103 = vadd.f32 %v101, %v102
    %s104 = vtos %v103
    %s105 = scalar_lea.smem [#allocation2], 0
    %106 = sst [smem:[%s105]] %s104
    // Predicated region
    $region14: #{trends_loss.1} parent=1 // pred_check
      _
    $region15: #{trends_loss.1} parent=1 // pred_check_branch
      %108 = sbr.rel (0) target = $region17
    $region16: #{trends_loss.1} parent=1 // pred_region
      %s110 = ssub.s32 16, 16
      %111 = vsyncadd [#allocation3], %s110
      %114 = dma.smem_to_hbm [#allocation2], 16, %s3, [#allocation3]
    $region17: #{trends_loss.1} parent=1 // pred_fallthru
      _
    // Predicated region
    $region18: #{trends_loss.1} parent=1 // pred_check
      _
    $region19: #{trends_loss.1} parent=1 // pred_check_branch
      %116 = sbr.rel (0) target = $region21
    $region20: #{trends_loss.1} parent=1 // pred_region
      %117 = dma.done [#allocation3], 16
    $region21: #{trends_loss.1} parent=1 // pred_fallthru
      _
    %118 = sfence
    %119 = vsyncpa [#allocation3], 1

</llo_original>
